<compile_context>
chip_gen: v5e
topology: v5e:2x2
jax: 0.10.0
libtpu: 0.0.40
codegen_flags: <defaults>
</compile_context>

<pallas_src>
import jax
import jax.numpy as jnp
from jax.experimental import pallas as pl
from jax.experimental.pallas import tpu as pltpu

_LANES = 128
_ROW_GRANULE = 32                       # multiple of 8 (f32) / 16 (bf16) / 32 (i8, fp8) sublane packing
_TARGET_BLOCK_BYTES = 4 * 1024 * 1024   # ~4 MiB per block (86%+ of HBM roofline territory)
_MIN_TILE_ROWS = 256                    # don't split into blocks smaller than this


def _round_up(x: int, m: int) -> int:
    return -(-x // m) * m


def _sigmoid_kernel(x_ref, o_ref):
    # sigmoid(x) = 0.5 * tanh(0.5 * x) + 0.5 -> one EUP op per element, the
    # mul/add ride the VALU slots; kernel stays HBM-bound on all generations.
    x = x_ref[...].astype(jnp.float32)
    o_ref[...] = (0.5 * jnp.tanh(0.5 * x) + 0.5).astype(o_ref.dtype)


def _choose_tile_rows(rows: int, itemsize: int) -> int:
    """Pick a block height (in 128-lane rows) sized by bytes, not rows."""
    target_rows = max(
        _ROW_GRANULE,
        (_TARGET_BLOCK_BYTES // (_LANES * itemsize)) // _ROW_GRANULE * _ROW_GRANULE,
    )
    if rows <= 2 * _MIN_TILE_ROWS:
        # Tiny input: a single full-extent block (splitting would be pure
        # per-step overhead).
        return rows
    # Aim for >= 4 grid steps (even count shards cleanly across v7x's 2 TCs),
    # but never below the minimum block nor above the ~4 MiB target.
    tile = min(target_rows,
               max(_MIN_TILE_ROWS, _round_up(pl.cdiv(rows, 4), _ROW_GRANULE)))
    return tile


def _sigmoid_slab(slab: jnp.ndarray) -> jnp.ndarray:
    """Run the Pallas kernel on a lane-dense (rows, 128) slab."""
    rows, _ = slab.shape
    dtype = slab.dtype
    itemsize = jnp.dtype(dtype).itemsize
    tile_rows = _choose_tile_rows(rows, itemsize)
    grid = (pl.cdiv(rows, tile_rows),)   # Pallas masks the ragged last block
    n_elems = rows * _LANES

    return pl.pallas_call(
        _sigmoid_kernel,
        out_shape=jax.ShapeDtypeStruct((rows, _LANES), dtype),
        grid_spec=pltpu.PrefetchScalarGridSpec(
            num_scalar_prefetch=0,
            grid=grid,
            in_specs=[pl.BlockSpec((tile_rows, _LANES), lambda i: (i, 0))],
            out_specs=pl.BlockSpec((tile_rows, _LANES), lambda i: (i, 0)),
        ),
        compiler_params=pltpu.CompilerParams(
            dimension_semantics=("parallel",),   # shard steps across v7x's 2 TCs
            vmem_limit_bytes=32 * 1024 * 1024,   # 4x 4 MiB double-buffered blocks fit easily
        ),
        cost_estimate=pl.CostEstimate(
            flops=2 * n_elems,
            transcendentals=n_elems,
            bytes_accessed=2 * n_elems * itemsize,
        ),
    )(slab)


def pallas_sigmoid(x: jnp.ndarray) -> jnp.ndarray:
    """Elementwise sigmoid matching torch.sigmoid semantics (shape/dtype preserved)."""
    orig_shape = x.shape
    orig_dtype = x.dtype
    n = x.size

    flat = x.reshape(-1)
    n_main = (n // _LANES) * _LANES

    if n_main == 0:
        # Fewer than 128 elements: a kernel launch is pure overhead.
        return jax.nn.sigmoid(flat).astype(orig_dtype).reshape(orig_shape)

    if n_main == n:
        # Common case (conv activations): zero-copy lane-dense reshape.
        slab = flat.reshape(n // _LANES, _LANES)
        return _sigmoid_slab(slab).reshape(orig_shape)

    # Rare ragged case: Pallas on the multiple-of-128 prefix, tiny (<128 elem)
    # tail via plain jnp. Avoids materializing a padded copy of the whole
    # tensor and the full-tensor slice on the way out.
    head = flat[:n_main].reshape(n_main // _LANES, _LANES)
    head_out = _sigmoid_slab(head).reshape(-1)
    tail_out = jax.nn.sigmoid(flat[n_main:]).astype(orig_dtype)
    return jnp.concatenate([head_out, tail_out]).reshape(orig_shape)


if __name__ == "__main__":
    key = jax.random.PRNGKey(0)
    k0, k1, k2 = jax.random.split(key, 3)

    # Small NCHW input consistent with an EfficientNet activation (2048 elems,
    # divisible by 128 -> zero-copy single-block path).
    x = jax.random.normal(k0, (2, 4, 16, 16), dtype=jnp.float32)
    y = pallas_sigmoid(x)
    jax.block_until_ready(y)
    y_ref = jax.nn.sigmoid(x)
    assert y.shape == x.shape and y.dtype == x.dtype
    assert jnp.allclose(y, y_ref, atol=1e-5, rtol=1e-5)

    # Mid-size activation: exercises the multi-block grid (>= 4 steps).
    x_big = jax.random.normal(k1, (8, 64, 32, 32), dtype=jnp.float32)
    y_big = pallas_sigmoid(x_big)
    jax.block_until_ready(y_big)
    assert jnp.allclose(y_big, jax.nn.sigmoid(x_big), atol=1e-5, rtol=1e-5)

    # Ragged size (not a multiple of 128): exercises the prefix + tail path.
    x_rag = jax.random.normal(k2, (3, 70), dtype=jnp.float32)
    y_rag = pallas_sigmoid(x_rag)
    jax.block_until_ready(y_rag)
    assert y_rag.shape == x_rag.shape and y_rag.dtype == x_rag.dtype
    assert jnp.allclose(y_rag, jax.nn.sigmoid(x_rag), atol=1e-5, rtol=1e-5)

    print("KERNEL_OK")
</pallas_src>

<mosaic_0001>
module attributes {stable_mosaic.version = 11 : i64} {
  func.func @_sigmoid_kernel(%arg0: i32, %arg1: memref<16x128xf32, #tpu.memory_space<vmem>>, %arg2: memref<16x128xf32, #tpu.memory_space<vmem>>) attributes {dimension_semantics = [#tpu.dimension_semantics<parallel>], iteration_bounds = array<i64: 1>, scalar_prefetch = 0 : i64, scratch_operands = 0 : i64, tpu.core_type = #tpu.core_type<tc>, window_params = [{transform_indices = @transform_0, window_bounds = array<i64: 16, 128>}, {transform_indices = @transform_1, window_bounds = array<i64: 16, 128>}]} {
    %c0 = arith.constant 0 : index
    %c0_0 = arith.constant 0 : index
    %0 = vector.load %arg1[%c0, %c0_0] : memref<16x128xf32, #tpu.memory_space<vmem>>, vector<16x128xf32>
    %cst = arith.constant 5.000000e-01 : f32
    %1 = vector.broadcast %cst : f32 to vector<16x128xf32>
    %2 = arith.mulf %1, %0 : vector<16x128xf32>
    %3 = math.tanh %2 : vector<16x128xf32>
    %cst_1 = arith.constant 5.000000e-01 : f32
    %4 = vector.broadcast %cst_1 : f32 to vector<16x128xf32>
    %5 = arith.mulf %4, %3 : vector<16x128xf32>
    %cst_2 = arith.constant 5.000000e-01 : f32
    %6 = vector.broadcast %cst_2 : f32 to vector<16x128xf32>
    %7 = arith.addf %5, %6 : vector<16x128xf32>
    %c0_3 = arith.constant 0 : index
    %c0_4 = arith.constant 0 : index
    %8 = vector.load %arg2[%c0_3, %c0_4] : memref<16x128xf32, #tpu.memory_space<vmem>>, vector<16x128xf32>
    tpu.vector_store %arg2[%c0_3, %c0_4], %7 {strides = array<i32>} : memref<16x128xf32, #tpu.memory_space<vmem>>, vector<16x128xf32>,
    return
  }
  func.func @transform_0(%arg0: i32) -> (i32, i32) {
    %c0_i32 = arith.constant 0 : i32
    %c0_i32_0 = arith.constant 0 : i32
    return %arg0, %c0_i32 : i32, i32
  }
  func.func @transform_1(%arg0: i32) -> (i32, i32) {
    %c0_i32 = arith.constant 0 : i32
    %c0_i32_0 = arith.constant 0 : i32
    return %arg0, %c0_i32 : i32, i32
  }
}

</mosaic_0001>

<llo_original>
// kernel: tpu_custom_call.1
$region0: #{tpu_custom_call.1}
  #allocation0 [shape = 'u32[]', space=smem, size = 0x4, offset = 0x4, fixed_abs, tag = 'smem constant byte address 0x4 - core index']
  #allocation1 [shape = 'u32[72,128]{1,0:T(1,128)}', space=vmem, size = 0x9000, scoped, tag = 'internal scratch']
  %s0 = inlined_call_operand.hbm [shape: f32[16,128], index: 0, kind: input, shape index: {}]
  %s1 = inlined_call_operand.hbm [shape: f32[16,128], index: 1, kind: output, shape index: {}]
  %s2 = sld [smem:[#allocation0]]
  $region18: #{tpu_custom_call.1} parent=0
    _
  %s4 = ssub.s32 1, %s2
  %s5 = scalar_select 0, %s4, %s2
  $region1: #{tpu_custom_call.1} parent=0
    #allocation2 [shape = 'u8[8192]{0}', space=vmem, size = 0x2000, scoped, tag = 'input window, operand 0, single buffered']
    #allocation3 [shape = 's32[1]{0}', space=sflag, size = 0x4, scoped, tag = 'scoped memory for tpu_custom_call.1']
    #allocation4 [shape = 's32[1]{0}', space=sflag, size = 0x4, scoped, tag = 'scoped memory for tpu_custom_call.1']
    #allocation5 [shape = 'u8[8192]{0}', space=vmem, size = 0x2000, scoped, tag = 'output window, operand 0, single buffered']
    %6 = vsyncpa [#allocation3], 0
    %7 = vsyncpa [#allocation4], 0
    // Predicated region
    $region2: #{tpu_custom_call.1} parent=1 // pred_check
      _
    $region3: #{tpu_custom_call.1} parent=1 // pred_check_branch
      %9 = sbr.rel (0) target = $region5
    $region4: #{tpu_custom_call.1} parent=1 // pred_region
      %11 = vsyncadd [#allocation3], 0
      %s12 = sshll.u32 %s0, 4
      %s13 = int_to_ptr.hbm [resolvable:$true] %s12
      %s14 = sshll.u32 [#allocation2], 4
      %s15 = int_to_ptr.vmem [resolvable:$true] %s14
      %20 = dma.hbm_to_vmem [thread:$0]  %s13, 256, %s15, [#allocation3], 128, 128, 8
    $region5: #{tpu_custom_call.1} parent=1 // pred_fallthru
      _
    // Predicated region
    $region6: #{tpu_custom_call.1} parent=1 // pred_check
      _
    $region7: #{tpu_custom_call.1} parent=1 // pred_check_branch
      %22 = sbr.rel (0) target = $region9
    $region8: #{tpu_custom_call.1} parent=1 // pred_region
      %24 = dma.done [#allocation3], 256
    $region9: #{tpu_custom_call.1} parent=1 // pred_fallthru
      _
    %v25 = vld [vmem:[#allocation2] sm:$0xff]
    %v26 = vld [vmem:[#allocation2 + $0x8] sm:$0xff]
    %v27 = vmul.f32 %v25, 0.5
    %v28 = vmul.f32 %v26, 0.5
    %v29 = vtanh.pop %v27
    %v30 = vtanh.pop %v28
    %v31 = vmul.f32 %v29, 0.5
    %v32 = vmul.f32 %v30, 0.5
    %v33 = vadd.f32 %v31, 0.5
    %v34 = vadd.f32 %v32, 0.5
    %35 = vst [vmem:[#allocation5] sm:$0xff] %v33
    %36 = vst [vmem:[#allocation5 + $0x8] sm:$0xff] %v34
    // Predicated region
    $region10: #{tpu_custom_call.1} parent=1 // pred_check
      _
    $region11: #{tpu_custom_call.1} parent=1 // pred_check_branch
      %38 = sbr.rel (0) target = $region13
    $region12: #{tpu_custom_call.1} parent=1 // pred_region
      %40 = vsyncadd [#allocation4], 0
      %s41 = sshll.u32 [#allocation5], 4
      %s42 = int_to_ptr.vmem [resolvable:$true] %s41
      %s43 = sshll.u32 %s1, 4
      %s44 = int_to_ptr.hbm [resolvable:$true] %s43
      %49 = dma.vmem_to_hbm [thread:$0]  %s42, 256, %s44, [#allocation4], 128, 128, 8
    $region13: #{tpu_custom_call.1} parent=1 // pred_fallthru
      _
    // Predicated region
    $region14: #{tpu_custom_call.1} parent=1 // pred_check
      _
    $region15: #{tpu_custom_call.1} parent=1 // pred_check_branch
      %51 = sbr.rel (0) target = $region17
    $region16: #{tpu_custom_call.1} parent=1 // pred_region
      %53 = dma.done [#allocation4], 256
    $region17: #{tpu_custom_call.1} parent=1 // pred_fallthru
      _
    %54 = vsyncpa [#allocation3], 1
    %55 = vsyncpa [#allocation4], 1

</llo_original>
